<compile_context>
chip_gen: v7x
topology: tpu7x:2x2x1
jax: 0.10.0
libtpu: 0.0.40
codegen_flags: <defaults>
</compile_context>

<pallas_src>
import jax
import jax.numpy as jnp
from jax.experimental import pallas as pl
from jax.experimental.pallas import tpu as pltpu


def _make_proj_kernel(n_out):
    """Kernel factory: one row tile of x against n_out resident weights.

    Signature: (x_ref, w_0..w_{n-1}, b_0..b_{n-1}, o_0..o_{n-1}).
    x is cast to bf16 on-chip, each matmul accumulates fp32 on the MXU, the
    fp32 bias is added to the accumulator and only the final store narrows.
    """
    def kernel(x_ref, *refs):
        w_refs = refs[:n_out]
        b_refs = refs[n_out:2 * n_out]
        o_refs = refs[2 * n_out:]
        xb = x_ref[...].astype(jnp.bfloat16)  # cast once, reuse for all dots
        for w_ref, b_ref, o_ref in zip(w_refs, b_refs, o_refs):
            acc = jnp.dot(xb, w_ref[...], preferred_element_type=jnp.float32)
            o_ref[...] = (acc + b_ref[...]).astype(o_ref.dtype)
    return kernel


def _plan_row_tile(M, C, widths, x_bytes, out_bytes, budget=48 * 1024 * 1024):
    """Pick the row tile + VMEM limit for the resident-weight plan.

    Budget ~48 MiB keeps headroom on v7x (64 MiB/TC); v5e/v6e (128 MiB) are
    comfortably covered by the same plan.
    """
    P = sum(widths)
    w_bytes = C * P * 2 + P * 4              # bf16 weights + f32 bias rows

    def working(tm):
        return (2 * w_bytes                  # worst case if runtime double-buffers W
                + 2 * tm * C * x_bytes       # streamed x row tiles (double-buffered)
                + tm * C * 2                 # in-kernel bf16 copy of the x tile
                + 2 * tm * P * out_bytes     # output tiles (double-buffered)
                + tm * P * 4)                # fp32 accumulators before the cast

    tm = None
    if M > 128:
        # Largest 128-multiple row tile that fits the budget AND leaves >= 2
        # blocks, so dimension_semantics=("parallel",) can shard across the
        # two v7x TensorCores.
        for cand in (1024, 512, 256, 128):
            if M % cand == 0 and M // cand >= 2 and working(cand) <= budget:
                tm = cand
                break
    if tm is None:
        tm = M                               # single full-extent block (small M)
    est = working(tm)
    # TODO(synk): for very large dim (fused weights >~40 MiB) fall back to a
    # column-strip grid with the row axis innermost instead of asserting.
    assert est <= budget, (
        f"resident-weight plan needs {est} B of VMEM (> {budget}); "
        "column-strip fallback not implemented")
    vmem_limit = int(min(max(est + (8 << 20), 32 << 20), 56 << 20))
    return tm, vmem_limit


def multi_projection(x2d, weights, biases, *, out_dtype):
    """Fused projections: (M, C) @ (C, P_i) + (1, P_i) -> (M, P_i), per i.

    * x2d: (M, C), any float dtype (cast to bf16 on-chip inside the kernel).
    * weights[i]: (C, P_i) bf16; biases[i]: (1, P_i) f32.
    * 1-D grid over row tiles of x; every weight/bias uses a constant block
      index, so Pallas DMAs them into VMEM once and keeps them resident.
    """
    M, C = x2d.shape
    n = len(weights)
    assert n == len(biases) and n >= 1
    widths = tuple(int(w.shape[1]) for w in weights)
    for w, b, p in zip(weights, biases, widths):
        assert w.shape == (C, p) and w.dtype == jnp.bfloat16
        assert b.shape == (1, p)

    x_bytes = x2d.dtype.itemsize
    out_bytes = jnp.dtype(out_dtype).itemsize
    tm, vmem_limit = _plan_row_tile(M, C, widths, x_bytes, out_bytes)
    grid = (pl.cdiv(M, tm),)

    in_specs = [pl.BlockSpec((tm, C), lambda i: (i, 0))]                      # streamed x
    in_specs += [pl.BlockSpec((C, p), lambda i: (0, 0)) for p in widths]      # resident W
    in_specs += [pl.BlockSpec((1, p), lambda i: (0, 0)) for p in widths]      # resident b
    out_specs = tuple(pl.BlockSpec((tm, p), lambda i: (i, 0)) for p in widths)
    out_shape = tuple(jax.ShapeDtypeStruct((M, p), out_dtype) for p in widths)

    P = sum(widths)
    cost = pl.CostEstimate(
        flops=2 * M * C * P,
        transcendentals=0,
        bytes_accessed=M * C * x_bytes + C * P * 2 + P * 4 + M * P * out_bytes)

    return pl.pallas_call(
        _make_proj_kernel(n),
        out_shape=out_shape,
        grid_spec=pltpu.PrefetchScalarGridSpec(
            num_scalar_prefetch=0,
            grid=grid,
            in_specs=in_specs,
            out_specs=out_specs,
        ),
        compiler_params=pltpu.CompilerParams(
            dimension_semantics=("parallel",),
            vmem_limit_bytes=vmem_limit,
        ),
        cost_estimate=cost,
    )(x2d, *weights, *biases)


class LinearProjectionPallas:
    """JAX/Pallas port of fixformer.LinearProjection (forward only).

    The projection output dtype defaults to bf16 (halves writeback / glue
    traffic; what a downstream attention kernel consumes). Pass
    out_dtype=jnp.float32 to match the nn.Linear output dtype exactly.
    """

    def __init__(self, dim, heads=8, dim_head=64, bias=True,
                 out_dtype=jnp.bfloat16, key=None):
        inner_dim = dim_head * heads
        # The PyTorch forward reshapes the projection with C // heads, which is
        # only well-formed when inner_dim == dim.
        assert dim == inner_dim, (
            "LinearProjection requires dim == heads * dim_head for its "
            "reshape to be well-formed")
        self.dim = dim
        self.heads = heads
        self.inner_dim = inner_dim
        self.out_dtype = out_dtype

        key = jax.random.PRNGKey(0) if key is None else key
        k1, k2, k3, k4 = jax.random.split(key, 4)
        bound = 1.0 / (dim ** 0.5)
        # nn.Linear weight shapes: to_q (inner_dim, dim), to_kv (2*inner_dim, dim)
        self.wq = jax.random.uniform(k1, (inner_dim, dim), jnp.float32,
                                     -bound, bound)
        self.wkv = jax.random.uniform(k2, (2 * inner_dim, dim), jnp.float32,
                                      -bound, bound)
        if bias:
            self.bq = jax.random.uniform(k3, (inner_dim,), jnp.float32,
                                         -bound, bound)
            self.bkv = jax.random.uniform(k4, (2 * inner_dim,), jnp.float32,
                                          -bound, bound)
        else:
            self.bq = jnp.zeros((inner_dim,), jnp.float32)
            self.bkv = jnp.zeros((2 * inner_dim,), jnp.float32)

        # Kernel-side parameters: pre-transposed bf16 weights (dim, inner) and
        # fp32 bias rows (1, inner), one per output (q, k, v).  inner_dim is a
        # 128-multiple for realistic heads*dim_head configs, so each output
        # slab is lane-dense without any padding or post-kernel slicing.
        self.wq_t = self.wq.T.astype(jnp.bfloat16)
        self.wk_t = self.wkv[:inner_dim].T.astype(jnp.bfloat16)
        self.wv_t = self.wkv[inner_dim:].T.astype(jnp.bfloat16)
        self.bq_r = self.bq[None, :].astype(jnp.float32)
        self.bk_r = self.bkv[:inner_dim][None, :].astype(jnp.float32)
        self.bv_r = self.bkv[inner_dim:][None, :].astype(jnp.float32)

    def __call__(self, x, attn_kv=None):
        B_, N, C = x.shape
        assert C == self.dim
        head_dim = C // self.heads

        if attn_kv is None:
            # Self-attention: one kernel call computes q, k, v from the same
            # streamed x row tiles against three resident weight matrices.
            q2d, k2d, v2d = multi_projection(
                x.reshape(B_ * N, C),
                (self.wq_t, self.wk_t, self.wv_t),
                (self.bq_r, self.bk_r, self.bv_r),
                out_dtype=self.out_dtype)
            N_kv = N
        else:
            # Cross-attention: q from x, k/v from attn_kv (attn_kv's own
            # sequence length is used for the reshape).
            B_kv, N_kv, C_kv = attn_kv.shape
            assert B_kv == B_ and C_kv == C
            (q2d,) = multi_projection(
                x.reshape(B_ * N, C), (self.wq_t,), (self.bq_r,),
                out_dtype=self.out_dtype)
            k2d, v2d = multi_projection(
                attn_kv.reshape(B_kv * N_kv, C),
                (self.wk_t, self.wv_t), (self.bk_r, self.bv_r),
                out_dtype=self.out_dtype)

        # Head split + transpose to the module's (B, heads, N, head_dim) return
        # layout.  Kept in XLA glue on purpose: putting head_dim (< 128) on the
        # kernel's last dim would drop lane density and force masked stores.
        q = q2d.reshape(B_, N, self.heads, head_dim).transpose(0, 2, 1, 3)
        k = k2d.reshape(B_, N_kv, self.heads, head_dim).transpose(0, 2, 1, 3)
        v = v2d.reshape(B_, N_kv, self.heads, head_dim).transpose(0, 2, 1, 3)
        return q, k, v


def _reference(x, attn_kv, wq, bq, wkv, bkv, heads, out_dtype):
    """Pure-JAX reference reproducing the PyTorch forward with the same
    bf16-operand / fp32-accumulate / narrow-on-store numerics as the kernel."""
    B_, N, C = x.shape
    N_kv = attn_kv.shape[1]
    head_dim = C // heads
    xb = x.astype(jnp.bfloat16).reshape(B_ * N, C)
    kb = attn_kv.astype(jnp.bfloat16).reshape(B_ * N_kv, C)
    q_lin = (jnp.dot(xb, wq.T.astype(jnp.bfloat16),
                     preferred_element_type=jnp.float32) + bq).astype(out_dtype)
    kv_lin = (jnp.dot(kb, wkv.T.astype(jnp.bfloat16),
                      preferred_element_type=jnp.float32) + bkv).astype(out_dtype)
    q = q_lin.reshape(B_, N, 1, heads, head_dim).transpose(2, 0, 3, 1, 4)[0]
    kv = kv_lin.reshape(B_, N_kv, 2, heads, head_dim).transpose(2, 0, 3, 1, 4)
    return q, kv[0], kv[1]


def _close(a, b):
    return jnp.allclose(a.astype(jnp.float32), b.astype(jnp.float32),
                        atol=3e-2, rtol=3e-2)


if __name__ == "__main__":
    B, N = 2, 8
    heads, dim_head = 4, 8
    dim = heads * dim_head  # = 32, required for the reshape to be well-formed

    key = jax.random.PRNGKey(0)
    kx, kkv, kp = jax.random.split(key, 3)
    x = jax.random.normal(kx, (B, N, dim), jnp.float32)
    attn_kv = jax.random.normal(kkv, (B, N, dim), jnp.float32)

    mod = LinearProjectionPallas(dim, heads=heads, dim_head=dim_head,
                                 bias=True, key=kp)

    # --- self-attention path (single fused q/k/v kernel call) ---
    q, k, v = jax.block_until_ready(mod(x))
    q_ref, k_ref, v_ref = _reference(x, x, mod.wq, mod.bq, mod.wkv, mod.bkv,
                                     heads, mod.out_dtype)
    assert q.shape == (B, heads, N, dim // heads)
    assert k.shape == (B, heads, N, dim // heads)
    assert v.shape == (B, heads, N, dim // heads)
    assert _close(q, q_ref)
    assert _close(k, k_ref)
    assert _close(v, v_ref)

    # --- cross-attention path (separate kv source) ---
    q2, k2, v2 = jax.block_until_ready(mod(x, attn_kv))
    q2_ref, k2_ref, v2_ref = _reference(x, attn_kv, mod.wq, mod.bq, mod.wkv,
                                        mod.bkv, heads, mod.out_dtype)
    assert q2.shape == (B, heads, N, dim // heads)
    assert k2.shape == (B, heads, N, dim // heads)
    assert v2.shape == (B, heads, N, dim // heads)
    assert _close(q2, q2_ref)
    assert _close(k2, k2_ref)
    assert _close(v2, v2_ref)

    print("KERNEL_OK")
</pallas_src>

<mosaic_0001>
module attributes {stable_mosaic.version = 11 : i64} {
  func.func @kernel(%arg0: i32, %arg1: memref<16x32xf32, #tpu.memory_space<vmem>>, %arg2: memref<32x32xbf16, #tpu.memory_space<vmem>>, %arg3: memref<32x32xbf16, #tpu.memory_space<vmem>>, %arg4: memref<32x32xbf16, #tpu.memory_space<vmem>>, %arg5: memref<1x32xf32, #tpu.memory_space<vmem>>, %arg6: memref<1x32xf32, #tpu.memory_space<vmem>>, %arg7: memref<1x32xf32, #tpu.memory_space<vmem>>, %arg8: memref<16x32xbf16, #tpu.memory_space<vmem>>, %arg9: memref<16x32xbf16, #tpu.memory_space<vmem>>, %arg10: memref<16x32xbf16, #tpu.memory_space<vmem>>) attributes {dimension_semantics = [#tpu.dimension_semantics<parallel>], iteration_bounds = array<i64: 1>, scalar_prefetch = 0 : i64, scratch_operands = 0 : i64, tpu.core_type = #tpu.core_type<tc>, window_params = [{transform_indices = @transform_0, window_bounds = array<i64: 16, 32>}, {pipeline_mode = #tpu.pipeline_mode<synchronous>, transform_indices = @transform_1, window_bounds = array<i64: 32, 32>}, {pipeline_mode = #tpu.pipeline_mode<synchronous>, transform_indices = @transform_2, window_bounds = array<i64: 32, 32>}, {pipeline_mode = #tpu.pipeline_mode<synchronous>, transform_indices = @transform_3, window_bounds = array<i64: 32, 32>}, {pipeline_mode = #tpu.pipeline_mode<synchronous>, transform_indices = @transform_4, window_bounds = array<i64: 1, 32>}, {pipeline_mode = #tpu.pipeline_mode<synchronous>, transform_indices = @transform_5, window_bounds = array<i64: 1, 32>}, {pipeline_mode = #tpu.pipeline_mode<synchronous>, transform_indices = @transform_6, window_bounds = array<i64: 1, 32>}, {transform_indices = @transform_7, window_bounds = array<i64: 16, 32>}, {transform_indices = @transform_8, window_bounds = array<i64: 16, 32>}, {transform_indices = @transform_9, window_bounds = array<i64: 16, 32>}]} {
    %c0 = arith.constant 0 : index
    %c0_0 = arith.constant 0 : index
    %0 = vector.load %arg1[%c0, %c0_0] : memref<16x32xf32, #tpu.memory_space<vmem>>, vector<16x32xf32>
    %1 = arith.truncf %0 : vector<16x32xf32> to vector<16x32xbf16>
    %c0_1 = arith.constant 0 : index
    %c0_2 = arith.constant 0 : index
    %2 = vector.load %arg2[%c0_1, %c0_2] : memref<32x32xbf16, #tpu.memory_space<vmem>>, vector<32x32xbf16>
    %cst = arith.constant dense<0.000000e+00> : vector<16x32xf32>
    %3 = tpu.matmul %1, %2, %cst {dimension_numbers = #tpu.dot_dimension_numbers<[1], [0], [0], [1], [0, 0, 1, 1], [], []>} : vector<16x32xbf16>, vector<32x32xbf16>, vector<16x32xf32> -> vector<16x32xf32>
    %c0_3 = arith.constant 0 : index
    %c0_4 = arith.constant 0 : index
    %4 = vector.load %arg5[%c0_3, %c0_4] : memref<1x32xf32, #tpu.memory_space<vmem>>, vector<1x32xf32>
    %5 = vector.broadcast %4 : vector<1x32xf32> to vector<16x32xf32>
    %6 = arith.addf %3, %5 : vector<16x32xf32>
    %7 = arith.truncf %6 : vector<16x32xf32> to vector<16x32xbf16>
    %c0_5 = arith.constant 0 : index
    %c0_6 = arith.constant 0 : index
    %8 = vector.load %arg8[%c0_5, %c0_6] : memref<16x32xbf16, #tpu.memory_space<vmem>>, vector<16x32xbf16>
    tpu.vector_store %arg8[%c0_5, %c0_6], %7 {strides = array<i32>} : memref<16x32xbf16, #tpu.memory_space<vmem>>, vector<16x32xbf16>,
    %c0_7 = arith.constant 0 : index
    %c0_8 = arith.constant 0 : index
    %9 = vector.load %arg3[%c0_7, %c0_8] : memref<32x32xbf16, #tpu.memory_space<vmem>>, vector<32x32xbf16>
    %cst_9 = arith.constant dense<0.000000e+00> : vector<16x32xf32>
    %10 = tpu.matmul %1, %9, %cst_9 {dimension_numbers = #tpu.dot_dimension_numbers<[1], [0], [0], [1], [0, 0, 1, 1], [], []>} : vector<16x32xbf16>, vector<32x32xbf16>, vector<16x32xf32> -> vector<16x32xf32>
    %c0_10 = arith.constant 0 : index
    %c0_11 = arith.constant 0 : index
    %11 = vector.load %arg6[%c0_10, %c0_11] : memref<1x32xf32, #tpu.memory_space<vmem>>, vector<1x32xf32>
    %12 = vector.broadcast %11 : vector<1x32xf32> to vector<16x32xf32>
    %13 = arith.addf %10, %12 : vector<16x32xf32>
    %14 = arith.truncf %13 : vector<16x32xf32> to vector<16x32xbf16>
    %c0_12 = arith.constant 0 : index
    %c0_13 = arith.constant 0 : index
    %15 = vector.load %arg9[%c0_12, %c0_13] : memref<16x32xbf16, #tpu.memory_space<vmem>>, vector<16x32xbf16>
    tpu.vector_store %arg9[%c0_12, %c0_13], %14 {strides = array<i32>} : memref<16x32xbf16, #tpu.memory_space<vmem>>, vector<16x32xbf16>,
    %c0_14 = arith.constant 0 : index
    %c0_15 = arith.constant 0 : index
    %16 = vector.load %arg4[%c0_14, %c0_15] : memref<32x32xbf16, #tpu.memory_space<vmem>>, vector<32x32xbf16>
    %cst_16 = arith.constant dense<0.000000e+00> : vector<16x32xf32>
    %17 = tpu.matmul %1, %16, %cst_16 {dimension_numbers = #tpu.dot_dimension_numbers<[1], [0], [0], [1], [0, 0, 1, 1], [], []>} : vector<16x32xbf16>, vector<32x32xbf16>, vector<16x32xf32> -> vector<16x32xf32>
    %c0_17 = arith.constant 0 : index
    %c0_18 = arith.constant 0 : index
    %18 = vector.load %arg7[%c0_17, %c0_18] : memref<1x32xf32, #tpu.memory_space<vmem>>, vector<1x32xf32>
    %19 = vector.broadcast %18 : vector<1x32xf32> to vector<16x32xf32>
    %20 = arith.addf %17, %19 : vector<16x32xf32>
    %21 = arith.truncf %20 : vector<16x32xf32> to vector<16x32xbf16>
    %c0_19 = arith.constant 0 : index
    %c0_20 = arith.constant 0 : index
    %22 = vector.load %arg10[%c0_19, %c0_20] : memref<16x32xbf16, #tpu.memory_space<vmem>>, vector<16x32xbf16>
    tpu.vector_store %arg10[%c0_19, %c0_20], %21 {strides = array<i32>} : memref<16x32xbf16, #tpu.memory_space<vmem>>, vector<16x32xbf16>,
    return
  }
  func.func @transform_0(%arg0: i32) -> (i32, i32) {
    %c0_i32 = arith.constant 0 : i32
    %c0_i32_0 = arith.constant 0 : i32
    return %arg0, %c0_i32 : i32, i32
  }
  func.func @transform_1(%arg0: i32) -> (i32, i32) {
    %c0_i32 = arith.constant 0 : i32
    %c0_i32_0 = arith.constant 0 : i32
    %c0_i32_1 = arith.constant 0 : i32
    return %c0_i32, %c0_i32_0 : i32, i32
  }
  func.func @transform_2(%arg0: i32) -> (i32, i32) {
    %c0_i32 = arith.constant 0 : i32
    %c0_i32_0 = arith.constant 0 : i32
    %c0_i32_1 = arith.constant 0 : i32
    return %c0_i32, %c0_i32_0 : i32, i32
  }
  func.func @transform_3(%arg0: i32) -> (i32, i32) {
    %c0_i32 = arith.constant 0 : i32
    %c0_i32_0 = arith.constant 0 : i32
    %c0_i32_1 = arith.constant 0 : i32
    return %c0_i32, %c0_i32_0 : i32, i32
  }
  func.func @transform_4(%arg0: i32) -> (i32, i32) {
    %c0_i32 = arith.constant 0 : i32
    %c0_i32_0 = arith.constant 0 : i32
    %c0_i32_1 = arith.constant 0 : i32
    return %c0_i32, %c0_i32_0 : i32, i32
  }
  func.func @transform_5(%arg0: i32) -> (i32, i32) {
    %c0_i32 = arith.constant 0 : i32
    %c0_i32_0 = arith.constant 0 : i32
    %c0_i32_1 = arith.constant 0 : i32
    return %c0_i32, %c0_i32_0 : i32, i32
  }
  func.func @transform_6(%arg0: i32) -> (i32, i32) {
    %c0_i32 = arith.constant 0 : i32
    %c0_i32_0 = arith.constant 0 : i32
    %c0_i32_1 = arith.constant 0 : i32
    return %c0_i32, %c0_i32_0 : i32, i32
  }
  func.func @transform_7(%arg0: i32) -> (i32, i32) {
    %c0_i32 = arith.constant 0 : i32
    %c0_i32_0 = arith.constant 0 : i32
    return %arg0, %c0_i32 : i32, i32
  }
  func.func @transform_8(%arg0: i32) -> (i32, i32) {
    %c0_i32 = arith.constant 0 : i32
    %c0_i32_0 = arith.constant 0 : i32
    return %arg0, %c0_i32 : i32, i32
  }
  func.func @transform_9(%arg0: i32) -> (i32, i32) {
    %c0_i32 = arith.constant 0 : i32
    %c0_i32_0 = arith.constant 0 : i32
    return %arg0, %c0_i32 : i32, i32
  }
}

</mosaic_0001>

<llo_original>
// kernel: tpu_custom_call.1
$region0: #{tpu_custom_call.1}
  #allocation0 [shape = 'u32[]', space=smem, size = 0x4, offset = 0x4, fixed_abs, tag = 'smem constant byte address 0x4 - core index']
  #allocation1 [shape = 'u32[144,128]{1,0:T(1,128)}', space=vmem, size = 0x12000, scoped, tag = 'internal scratch']
  %s0 = inlined_call_operand.hbm [shape: f32[16,32], index: 0, kind: input, shape index: {}]
  %s1 = inlined_call_operand.hbm [shape: bf16[32,32], index: 1, kind: input, shape index: {}]
  %s2 = inlined_call_operand.hbm [shape: bf16[32,32], index: 2, kind: input, shape index: {}]
  %s3 = inlined_call_operand.hbm [shape: bf16[32,32], index: 3, kind: input, shape index: {}]
  %s4 = inlined_call_operand.vmem [shape: f32[1,32], index: 4, kind: input, shape index: {}]
  %s5 = inlined_call_operand.vmem [shape: f32[1,32], index: 5, kind: input, shape index: {}]
  %s6 = inlined_call_operand.vmem [shape: f32[1,32], index: 6, kind: input, shape index: {}]
  %s7 = inlined_call_operand.hbm [shape: bf16[16,32], index: 7, kind: output, shape index: {0}]
  %s8 = inlined_call_operand.hbm [shape: bf16[16,32], index: 8, kind: output, shape index: {1}]
  %s9 = inlined_call_operand.hbm [shape: bf16[16,32], index: 9, kind: output, shape index: {2}]
  %10 = xla_tuple %s7, %s8, %s9
  %s11 = sld [smem:[#allocation0]]
  $region70: #{tpu_custom_call.1} parent=0
    _
  %s13 = ssub.s32 1, %s11
  %s14 = scalar_select 0, %s13, %s11
  $region1: #{tpu_custom_call.1} parent=0
    #allocation2 [shape = 'u8[8192]{0}', space=vmem, size = 0x2000, scoped, tag = 'input window, operand 0, single buffered']
    #allocation3 [shape = 's32[1]{0}', space=sflag, size = 0x4, scoped, tag = 'scoped memory for tpu_custom_call.1']
    #allocation4 [shape = 's32[1]{0}', space=sflag, size = 0x4, scoped, tag = 'scoped memory for tpu_custom_call.1']
    #allocation5 [shape = 'u8[8192]{0}', space=vmem, size = 0x2000, scoped, tag = 'input window, operand 1, single buffered']
    #allocation6 [shape = 's32[1]{0}', space=sflag, size = 0x4, scoped, tag = 'scoped memory for tpu_custom_call.1']
    #allocation7 [shape = 'u8[8192]{0}', space=vmem, size = 0x2000, scoped, tag = 'input window, operand 2, single buffered']
    #allocation8 [shape = 'u8[8192]{0}', space=vmem, size = 0x2000, scoped, tag = 'input window, operand 3, single buffered']
    #allocation9 [shape = 's32[1]{0}', space=sflag, size = 0x4, scoped, tag = 'scoped memory for tpu_custom_call.1']
    #allocation10 [shape = 'u8[4096]{0}', space=vmem, size = 0x1000, scoped, tag = 'output window, operand 0, single buffered']
    #allocation11 [shape = 'u8[4096]{0}', space=vmem, size = 0x1000, scoped, tag = 'output window, operand 1, single buffered']
    #allocation12 [shape = 's32[1]{0}', space=sflag, size = 0x4, scoped, tag = 'scoped memory for tpu_custom_call.1']
    #allocation13 [shape = 'u8[4096]{0}', space=vmem, size = 0x1000, scoped, tag = 'output window, operand 2, single buffered']
    %15 = vsyncpa [#allocation3], 0
    %16 = vsyncpa [#allocation6], 0
    %17 = vsyncpa [#allocation9], 0
    %18 = vsyncpa [#allocation4], 0
    %19 = vsyncpa [#allocation12], 0
    // Predicated region
    $region2: #{tpu_custom_call.1} parent=1 // pred_check
      _
    $region3: #{tpu_custom_call.1} parent=1 // pred_check_branch
      %21 = sbr.rel (0) target = $region5
    $region4: #{tpu_custom_call.1} parent=1 // pred_region
      %s23 = ssub.s32 256, 256
      %24 = vsyncadd [#allocation3], %s23
      %s25 = sshll.u32 [#allocation2], 4
      %s26 = int_to_ptr.vmem [resolvable:$true] %s25
      %31 = dma.hbm_to_vmem [thread:$0]  %s0, 256, %s26, [#allocation3], 128, 128, 8
    $region5: #{tpu_custom_call.1} parent=1 // pred_fallthru
      _
    // Predicated region
    $region6: #{tpu_custom_call.1} parent=1 // pred_check
      _
    $region7: #{tpu_custom_call.1} parent=1 // pred_check_branch
      %33 = sbr.rel (0) target = $region9
    $region8: #{tpu_custom_call.1} parent=1 // pred_region
      %s35 = ssub.s32 256, 256
      %36 = vsyncadd [#allocation6], %s35
      %s37 = sshll.u32 [#allocation5], 4
      %s38 = int_to_ptr.vmem [resolvable:$true] %s37
      %43 = dma.hbm_to_vmem [thread:$0]  %s1, 256, %s38, [#allocation6], 64, 64, 4
    $region9: #{tpu_custom_call.1} parent=1 // pred_fallthru
      _
    // Predicated region
    $region10: #{tpu_custom_call.1} parent=1 // pred_check
      _
    $region11: #{tpu_custom_call.1} parent=1 // pred_check_branch
      %45 = sbr.rel (0) target = $region13
    $region12: #{tpu_custom_call.1} parent=1 // pred_region
      %s47 = ssub.s32 256, 256
      %48 = vsyncadd [#allocation6], %s47
      %s49 = sshll.u32 [#allocation7], 4
      %s50 = int_to_ptr.vmem [resolvable:$true] %s49
      %55 = dma.hbm_to_vmem [thread:$0]  %s2, 256, %s50, [#allocation6], 64, 64, 4
    $region13: #{tpu_custom_call.1} parent=1 // pred_fallthru
      _
    // Predicated region
    $region14: #{tpu_custom_call.1} parent=1 // pred_check
      _
    $region15: #{tpu_custom_call.1} parent=1 // pred_check_branch
      %57 = sbr.rel (0) target = $region17
    $region16: #{tpu_custom_call.1} parent=1 // pred_region
      %s59 = ssub.s32 256, 256
      %60 = vsyncadd [#allocation9], %s59
      %s61 = sshll.u32 [#allocation8], 4
      %s62 = int_to_ptr.vmem [resolvable:$true] %s61
      %67 = dma.hbm_to_vmem [thread:$0]  %s3, 256, %s62, [#allocation9], 64, 64, 4
    $region17: #{tpu_custom_call.1} parent=1 // pred_fallthru
      _
    // Predicated region
    $region18: #{tpu_custom_call.1} parent=1 // pred_check
      _
    $region19: #{tpu_custom_call.1} parent=1 // pred_check_branch
      %69 = sbr.rel (0) target = $region21
    $region20: #{tpu_custom_call.1} parent=1 // pred_region
      _
    $region21: #{tpu_custom_call.1} parent=1 // pred_fallthru
      _
    // Predicated region
    $region22: #{tpu_custom_call.1} parent=1 // pred_check
      _
    $region23: #{tpu_custom_call.1} parent=1 // pred_check_branch
      %71 = sbr.rel (0) target = $region25
    $region24: #{tpu_custom_call.1} parent=1 // pred_region
      _
    $region25: #{tpu_custom_call.1} parent=1 // pred_fallthru
      _
    // Predicated region
    $region26: #{tpu_custom_call.1} parent=1 // pred_check
      _
    $region27: #{tpu_custom_call.1} parent=1 // pred_check_branch
      %73 = sbr.rel (0) target = $region29
    $region28: #{tpu_custom_call.1} parent=1 // pred_region
      _
    $region29: #{tpu_custom_call.1} parent=1 // pred_fallthru
      _
    // Predicated region
    $region30: #{tpu_custom_call.1} parent=1 // pred_check
      _
    $region31: #{tpu_custom_call.1} parent=1 // pred_check_branch
      %75 = sbr.rel (0) target = $region33
    $region32: #{tpu_custom_call.1} parent=1 // pred_region
      %76 = dma.done [#allocation3], 256
    $region33: #{tpu_custom_call.1} parent=1 // pred_fallthru
      _
    // Predicated region
    $region34: #{tpu_custom_call.1} parent=1 // pred_check
      _
    $region35: #{tpu_custom_call.1} parent=1 // pred_check_branch
      %78 = sbr.rel (0) target = $region37
    $region36: #{tpu_custom_call.1} parent=1 // pred_region
      %79 = dma.done [#allocation6], 256
    $region37: #{tpu_custom_call.1} parent=1 // pred_fallthru
      _
    // Predicated region
    $region38: #{tpu_custom_call.1} parent=1 // pred_check
      _
    $region39: #{tpu_custom_call.1} parent=1 // pred_check_branch
      %81 = sbr.rel (0) target = $region41
    $region40: #{tpu_custom_call.1} parent=1 // pred_region
      %82 = dma.done [#allocation6], 256
    $region41: #{tpu_custom_call.1} parent=1 // pred_fallthru
      _
    // Predicated region
    $region42: #{tpu_custom_call.1} parent=1 // pred_check
      _
    $region43: #{tpu_custom_call.1} parent=1 // pred_check_branch
      %84 = sbr.rel (0) target = $region45
    $region44: #{tpu_custom_call.1} parent=1 // pred_region
      %85 = dma.done [#allocation9], 256
    $region45: #{tpu_custom_call.1} parent=1 // pred_fallthru
      _
    %v87 = vld [vmem:[#allocation2] sm:$0xff]
    %v88 = vld [vmem:[#allocation2 + $0x8] sm:$0xff]
    %v89 = vpack.c.bf16 %v88, %v87
    %v90 = vld [vmem:[#allocation5] sm:$0xf]
    %v91 = vld [vmem:[#allocation5 + $0x4] sm:$0xf]
    %v92 = vld [vmem:[#allocation5 + $0x8] sm:$0xf]
    %v93 = vld [vmem:[#allocation5 + $0xc] sm:$0xf]
    %v94 = vld [vmem:[%s4] sm:$0x1]
    %v96 = vlaneseq
    %v97 = vshrl.u32 %v96, 7
    %v98 = vsub.s32 0, %v97
    %v99 = vrot.slane %v94, %v98
    %v105 = vunpack.c.l.b16 %v90
    %v106 = vunpack.c.l.b16 %v91
    %v107 = vunpack.c.l.b16 %v92
    %v108 = vunpack.c.l.b16 %v93
    %v109 = vpack.c.b16 %v106, %v105
    %v110 = vpack.c.b16 %v108, %v107
    %vm113 = vcmask 261120
    %v115 = vsel %vm113, %v89, 0
    %117 = vmatprep.subr.bf16.mxu0 0
    %118 = vmatpush1.bf16.msra.mxu0 %v109
    %119 = vmatprep.subr.bf16.mxu0 0
    %120 = vmatpush1.bf16.msra.mxu0 %v110
    %121 = vmatprep.subr.bf16.mxu0 0
    %122 = vmatpush1.bf16.msra.mxu0 0
    %123 = vmatprep.subr.bf16.mxu0 0
    %124 = vmatpush1.bf16.msra.mxu0 0
    %125 = vmatprep.subr.bf16.mxu0 0
    %126 = vmatpush1.bf16.msra.mxu0 0
    %127 = vmatprep.subr.bf16.mxu0 0
    %128 = vmatpush1.bf16.msra.mxu0 0
    %129 = vmatprep.subr.bf16.mxu0 0
    %130 = vmatpush1.bf16.msra.mxu0 0
    %131 = vmatprep.subr.bf16.mxu0 0
    %132 = vmatpush1.bf16.msra.mxu0 0
    %133 = vmatprep.subr.bf16.mxu0 0
    %134 = vmatpush1.bf16.msra.mxu0 0
    %135 = vmatprep.subr.bf16.mxu0 0
    %136 = vmatpush1.bf16.msra.mxu0 0
    %137 = vmatprep.subr.bf16.mxu0 0
    %138 = vmatpush1.bf16.msra.mxu0 0
    %139 = vmatprep.subr.bf16.mxu0 0
    %140 = vmatpush1.bf16.msra.mxu0 0
    %141 = vmatprep.subr.bf16.mxu0 0
    %142 = vmatpush1.bf16.msra.mxu0 0
    %143 = vmatprep.subr.bf16.mxu0 0
    %144 = vmatpush1.bf16.msra.mxu0 0
    %145 = vmatprep.subr.bf16.mxu0 0
    %146 = vmatpush1.bf16.msra.mxu0 0
    %147 = vmatprep.subr.bf16.mxu0 0
    %148 = vmatpush1.bf16.msra.mxu0 0
    %149 = vmatprep.mubr.bf16.mxu0 0
    %150 = vmatmul.mubr.bf16.gmra.mrb[0].mxu0 %v115
    %v151 = vpop.f32.mrb[0].mxu0
    %v152 = vadd.f32 %v99, %v151
    %v153 = vpop.f32.mrb[0].mxu0
    %v154 = vpop.f32.mrb[0].mxu0
    %v155 = vadd.f32 %v99, %v154
    %v156 = vpop.f32.mrb[0].mxu0
    %157 = vdwg.mxu0
    %v158 = vpack.c.bf16 %v155, %v152
    %v160 = vunpack.c.l.b16 %v158
    %v161 = vunpack.c.h.b16 %v158
    %v162 = vpack.c.b16 %v160, %v160
    %v163 = vpack.c.b16 %v161, %v161
    %vm166 = vcmask 257024
    %167 = vst.msk [vmem:[#allocation10] sm:$0xf] %vm166, %v162
    %168 = vst.msk [vmem:[#allocation10 + $0x4] sm:$0xf] %vm166, %v163
    %v169 = vld [vmem:[#allocation7] sm:$0xf]
    %v170 = vld [vmem:[#allocation7 + $0x4] sm:$0xf]
    %v171 = vld [vmem:[#allocation7 + $0x8] sm:$0xf]
    %v172 = vld [vmem:[#allocation7 + $0xc] sm:$0xf]
    %v173 = vld [vmem:[%s5] sm:$0x1]
    %v175 = vlaneseq
    %v176 = vshrl.u32 %v175, 7
    %v177 = vsub.s32 0, %v176
    %v178 = vrot.slane %v173, %v177
    %v184 = vunpack.c.l.b16 %v169
    %v185 = vunpack.c.l.b16 %v170
    %v186 = vunpack.c.l.b16 %v171
    %v187 = vunpack.c.l.b16 %v172
    %v188 = vpack.c.b16 %v185, %v184
    %v189 = vpack.c.b16 %v187, %v186
    %192 = vmatprep.subr.bf16.mxu0 0
    %193 = vmatpush1.bf16.msra.mxu0 %v188
    %194 = vmatprep.subr.bf16.mxu0 0
    %195 = vmatpush1.bf16.msra.mxu0 %v189
    %196 = vmatprep.subr.bf16.mxu0 0
    %197 = vmatpush1.bf16.msra.mxu0 0
    %198 = vmatprep.subr.bf16.mxu0 0
    %199 = vmatpush1.bf16.msra.mxu0 0
    %200 = vmatprep.subr.bf16.mxu0 0
    %201 = vmatpush1.bf16.msra.mxu0 0
    %202 = vmatprep.subr.bf16.mxu0 0
    %203 = vmatpush1.bf16.msra.mxu0 0
    %204 = vmatprep.subr.bf16.mxu0 0
    %205 = vmatpush1.bf16.msra.mxu0 0
    %206 = vmatprep.subr.bf16.mxu0 0
    %207 = vmatpush1.bf16.msra.mxu0 0
    %208 = vmatprep.subr.bf16.mxu0 0
    %209 = vmatpush1.bf16.msra.mxu0 0
    %210 = vmatprep.subr.bf16.mxu0 0
    %211 = vmatpush1.bf16.msra.mxu0 0
    %212 = vmatprep.subr.bf16.mxu0 0
    %213 = vmatpush1.bf16.msra.mxu0 0
    %214 = vmatprep.subr.bf16.mxu0 0
    %215 = vmatpush1.bf16.msra.mxu0 0
    %216 = vmatprep.subr.bf16.mxu0 0
    %217 = vmatpush1.bf16.msra.mxu0 0
    %218 = vmatprep.subr.bf16.mxu0 0
    %219 = vmatpush1.bf16.msra.mxu0 0
    %220 = vmatprep.subr.bf16.mxu0 0
    %221 = vmatpush1.bf16.msra.mxu0 0
    %222 = vmatprep.subr.bf16.mxu0 0
    %223 = vmatpush1.bf16.msra.mxu0 0
    %224 = vmatprep.mubr.bf16.mxu0 0
    %225 = vmatmul.mubr.bf16.gmra.mrb[0].mxu0 %v115
    %v226 = vpop.f32.mrb[0].mxu0
    %v227 = vadd.f32 %v178, %v226
    %v228 = vpop.f32.mrb[0].mxu0
    %v229 = vpop.f32.mrb[0].mxu0
    %v230 = vadd.f32 %v178, %v229
    %v231 = vpop.f32.mrb[0].mxu0
    %232 = vdwg.mxu0
    %v233 = vpack.c.bf16 %v230, %v227
    %v235 = vunpack.c.l.b16 %v233
    %v236 = vunpack.c.h.b16 %v233
    %v237 = vpack.c.b16 %v235, %v235
    %v238 = vpack.c.b16 %v236, %v236
    %241 = vst.msk [vmem:[#allocation11] sm:$0xf] %vm166, %v237
    %242 = vst.msk [vmem:[#allocation11 + $0x4] sm:$0xf] %vm166, %v238
    %v243 = vld [vmem:[#allocation8] sm:$0xf]
    %v244 = vld [vmem:[#allocation8 + $0x4] sm:$0xf]
    %v245 = vld [vmem:[#allocation8 + $0x8] sm:$0xf]
    %v246 = vld [vmem:[#allocation8 + $0xc] sm:$0xf]
    %v247 = vld [vmem:[%s6] sm:$0x1]
    %v249 = vlaneseq
    %v250 = vshrl.u32 %v249, 7
    %v251 = vsub.s32 0, %v250
    %v252 = vrot.slane %v247, %v251
    %v258 = vunpack.c.l.b16 %v243
    %v259 = vunpack.c.l.b16 %v244
    %v260 = vunpack.c.l.b16 %v245
    %v261 = vunpack.c.l.b16 %v246
    %v262 = vpack.c.b16 %v259, %v258
    %v263 = vpack.c.b16 %v261, %v260
    %266 = vmatprep.subr.bf16.mxu0 0
    %267 = vmatpush1.bf16.msra.mxu0 %v262
    %268 = vmatprep.subr.bf16.mxu0 0
    %269 = vmatpush1.bf16.msra.mxu0 %v263
    %270 = vmatprep.subr.bf16.mxu0 0
    %271 = vmatpush1.bf16.msra.mxu0 0
    %272 = vmatprep.subr.bf16.mxu0 0
    %273 = vmatpush1.bf16.msra.mxu0 0
    %274 = vmatprep.subr.bf16.mxu0 0
    %275 = vmatpush1.bf16.msra.mxu0 0
    %276 = vmatprep.subr.bf16.mxu0 0
    %277 = vmatpush1.bf16.msra.mxu0 0
    %278 = vmatprep.subr.bf16.mxu0 0
    %279 = vmatpush1.bf16.msra.mxu0 0
    %280 = vmatprep.subr.bf16.mxu0 0
    %281 = vmatpush1.bf16.msra.mxu0 0
    %282 = vmatprep.subr.bf16.mxu0 0
    %283 = vmatpush1.bf16.msra.mxu0 0
    %284 = vmatprep.subr.bf16.mxu0 0
    %285 = vmatpush1.bf16.msra.mxu0 0
    %286 = vmatprep.subr.bf16.mxu0 0
    %287 = vmatpush1.bf16.msra.mxu0 0
    %288 = vmatprep.subr.bf16.mxu0 0
    %289 = vmatpush1.bf16.msra.mxu0 0
    %290 = vmatprep.subr.bf16.mxu0 0
    %291 = vmatpush1.bf16.msra.mxu0 0
    %292 = vmatprep.subr.bf16.mxu0 0
    %293 = vmatpush1.bf16.msra.mxu0 0
    %294 = vmatprep.subr.bf16.mxu0 0
    %295 = vmatpush1.bf16.msra.mxu0 0
    %296 = vmatprep.subr.bf16.mxu0 0
    %297 = vmatpush1.bf16.msra.mxu0 0
    %298 = vmatprep.mubr.bf16.mxu0 0
    %299 = vmatmul.mubr.bf16.gmra.mrb[0].mxu0 %v115
    %v300 = vpop.f32.mrb[0].mxu0
    %v301 = vadd.f32 %v252, %v300
    %v302 = vpop.f32.mrb[0].mxu0
    %v303 = vpop.f32.mrb[0].mxu0
    %v304 = vadd.f32 %v252, %v303
    %v305 = vpop.f32.mrb[0].mxu0
    %306 = vdwg.mxu0
    %v307 = vpack.c.bf16 %v304, %v301
    %v309 = vunpack.c.l.b16 %v307
    %v310 = vunpack.c.h.b16 %v307
    %v311 = vpack.c.b16 %v309, %v309
    %v312 = vpack.c.b16 %v310, %v310
    %315 = vst.msk [vmem:[#allocation13] sm:$0xf] %vm166, %v311
    %316 = vst.msk [vmem:[#allocation13 + $0x4] sm:$0xf] %vm166, %v312
    // Predicated region
    $region46: #{tpu_custom_call.1} parent=1 // pred_check
      _
    $region47: #{tpu_custom_call.1} parent=1 // pred_check_branch
      %318 = sbr.rel (0) target = $region49
    $region48: #{tpu_custom_call.1} parent=1 // pred_region
      %s320 = ssub.s32 128, 128
      %321 = vsyncadd [#allocation4], %s320
      %s322 = sshll.u32 [#allocation10], 4
      %s323 = int_to_ptr.vmem [resolvable:$true] %s322
      %328 = dma.vmem_to_hbm [thread:$0]  %s323, 128, %s7, [#allocation4], 64, 64, 4
    $region49: #{tpu_custom_call.1} parent=1 // pred_fallthru
      _
    // Predicated region
    $region50: #{tpu_custom_call.1} parent=1 // pred_check
      _
    $region51: #{tpu_custom_call.1} parent=1 // pred_check_branch
      %330 = sbr.rel (0) target = $region53
    $region52: #{tpu_custom_call.1} parent=1 // pred_region
      %s332 = ssub.s32 128, 128
      %333 = vsyncadd [#allocation12], %s332
      %s334 = sshll.u32 [#allocation11], 4
      %s335 = int_to_ptr.vmem [resolvable:$true] %s334
      %340 = dma.vmem_to_hbm [thread:$0]  %s335, 128, %s8, [#allocation12], 64, 64, 4
    $region53: #{tpu_custom_call.1} parent=1 // pred_fallthru
      _
    // Predicated region
    $region54: #{tpu_custom_call.1} parent=1 // pred_check
      _
    $region55: #{tpu_custom_call.1} parent=1 // pred_check_branch
      %342 = sbr.rel (0) target = $region57
    $region56: #{tpu_custom_call.1} parent=1 // pred_region
      %s344 = ssub.s32 128, 128
      %345 = vsyncadd [#allocation12], %s344
      %s346 = sshll.u32 [#allocation13], 4
      %s347 = int_to_ptr.vmem [resolvable:$true] %s346
      %352 = dma.vmem_to_hbm [thread:$0]  %s347, 128, %s9, [#allocation12], 64, 64, 4
    $region57: #{tpu_custom_call.1} parent=1 // pred_fallthru
      _
    // Predicated region
    $region58: #{tpu_custom_call.1} parent=1 // pred_check
      _
    $region59: #{tpu_custom_call.1} parent=1 // pred_check_branch
      %354 = sbr.rel (0) target = $region61
    $region60: #{tpu_custom_call.1} parent=1 // pred_region
      %355 = dma.done [#allocation4], 128
    $region61: #{tpu_custom_call.1} parent=1 // pred_fallthru
      _
    // Predicated region
    $region62: #{tpu_custom_call.1} parent=1 // pred_check
      _
    $region63: #{tpu_custom_call.1} parent=1 // pred_check_branch
      %357 = sbr.rel (0) target = $region65
    $region64: #{tpu_custom_call.1} parent=1 // pred_region
      %358 = dma.done [#allocation12], 128
    $region65: #{tpu_custom_call.1} parent=1 // pred_fallthru
      _
    // Predicated region
    $region66: #{tpu_custom_call.1} parent=1 // pred_check
      _
    $region67: #{tpu_custom_call.1} parent=1 // pred_check_branch
      %360 = sbr.rel (0) target = $region69
    $region68: #{tpu_custom_call.1} parent=1 // pred_region
      %361 = dma.done [#allocation12], 128
    $region69: #{tpu_custom_call.1} parent=1 // pred_fallthru
      _
    %362 = vsyncpa [#allocation3], 1
    %363 = vsyncpa [#allocation6], 1
    %364 = vsyncpa [#allocation9], 1
    %365 = vsyncpa [#allocation4], 1
    %366 = vsyncpa [#allocation12], 1

</llo_original>
